<compile_context>
chip_gen: v5e
topology: v5e:2x2
jax: 0.10.0
libtpu: 0.0.40
codegen_flags: <defaults>
</compile_context>

<pallas_src>
import functools

import jax
import jax.numpy as jnp
import numpy as np
from jax import lax
from jax.experimental import pallas as pl
from jax.experimental.pallas import tpu as pltpu

_EPS = 1e-5  # InstanceNorm1d default eps


def _cdiv(a, b):
    return -(-a // b)


def _round_up(a, m):
    return _cdiv(a, m) * m


def _domain_loss_kernel(f_ref, out_ref, *, bsz):
    """Accumulate per-lane partial KL sums for one (tile_b, 2*D) batch tile."""
    tile_b = f_ref.shape[0]
    d = f_ref.shape[1] // 2

    c = pl.program_id(0)          # core / batch-shard axis ("parallel")
    j = pl.program_id(1)          # batch-tile axis ("arbitrary", reduction)
    inner = pl.num_programs(1)
    t = c * inner + j             # logical (unclamped) batch-tile index
    row0 = t * tile_b

    @pl.when(j == 0)
    def _init():
        out_ref[...] = jnp.zeros_like(out_ref)

    # MXU row-sum helper: reduce over D as a (TB, D) x (D, 1) matmul, keeping
    # the XLU free (the MXU is otherwise idle in this kernel).
    ones_col = jnp.ones((d, 1), jnp.float32)
    inv_d = jnp.float32(1.0 / d)

    def _instance_norm(x):
        # Per-row normalization over D, biased variance (InstanceNorm1d).
        mean = jnp.dot(x, ones_col, preferred_element_type=jnp.float32) * inv_d
        cen = x - mean
        var = jnp.dot(cen * cen, ones_col,
                      preferred_element_type=jnp.float32) * inv_d
        return cen * lax.rsqrt(var + _EPS)

    def _elem():
        # Both views are dense lane slices of the same block (no sublane
        # striding, no relayout for D % 128 == 0).
        anchor = f_ref[:, :d].astype(jnp.float32)
        target = f_ref[:, d:].astype(jnp.float32)
        a_n = _instance_norm(anchor)          # KLDiv "input"
        t_n = _instance_norm(target)          # KLDiv "target"
        # KLDivLoss pointwise term (log_target=False): xlogy(t, t) - t*input.
        # xlogy(0, 0) == 0 (matches torch); negative t -> NaN, matching torch.
        zero = jnp.float32(0.0)
        xlogy_tt = jnp.where(t_n == zero, zero, t_n * jnp.log(t_n))
        return xlogy_tt - t_n * a_n

    def _accumulate(elem):
        # Fold the TB rows into the (8, D) accumulator with plain VPU adds;
        # the final 8-sublane + cross-lane reduce happens once, in the
        # epilogue (which sums everything anyway).
        part = jnp.sum(elem.reshape(tile_b // 8, 8, d), axis=0)
        out_ref[...] += part[None]

    @pl.when(row0 + tile_b <= bsz)                       # fully in-bounds tile
    def _full_tile():
        _accumulate(_elem())

    @pl.when((row0 < bsz) & (row0 + tile_b > bsz))       # partial last tile
    def _partial_tile():
        rows = row0 + lax.broadcasted_iota(jnp.int32, (tile_b, 1), 0)
        valid = rows < bsz                               # (TB, 1)
        # where-select (not multiply) so NaNs from garbage rows cannot leak.
        _accumulate(jnp.where(valid, _elem(), jnp.float32(0.0)))

    # Overhang tiles of an uneven core split (row0 >= bsz): nothing to do;
    # their clamped DMA block is simply ignored.


def _pick_tile_b(bsz, d, itemsize):
    # Sublane packing: 8 rows for 32-bit dtypes, 16 for 16-bit dtypes.
    sub = 16 if itemsize == 2 else 8
    b_pad = _round_up(max(bsz, 1), sub)
    # One (TB, 2*D) input block is TB * 2*D * itemsize bytes.  Target ~2 MiB
    # per buffer (~4 MiB double-buffered), which leaves ample room for the
    # f32 intermediates inside the 32 MiB scoped-VMEM limit; cap at 1024 rows
    # (HBM roofline saturates around 512-row tiles, diminishing returns past).
    budget = 2 * 1024 * 1024
    tb = budget // (2 * d * itemsize)
    tb = max(sub, (tb // sub) * sub)
    return int(min(tb, 1024, b_pad))


def _multi_tensorcore():
    """Best-effort: does the default device expose >1 TensorCore per kernel?"""
    try:
        kind = jax.devices()[0].device_kind.lower().replace(" ", "")
    except Exception:
        return False
    if not kind.startswith("tpu"):
        return False
    # Single-TensorCore generations: v2/v3 (per-core devices), v5e, v6e.
    for tag in ("v2", "v3", "v5e", "v5lite", "v6e", "v6lite"):
        if tag in kind:
            return False
    # v4 / v5p (megacore) and v7x expose two TensorCores to one device.
    for tag in ("v4", "v5p", "v7", "7x"):
        if tag in kind:
            return True
    return False  # unknown -> conservative 1-core split (always correct)


def domain_loss(features, *, tile_b=None):
    """Pallas TPU implementation of DomainLoss.forward (returns 1 / KL)."""
    if features.ndim < 3:
        raise ValueError("`features` needs to be [bsz, n_views, ...],"
                         "at least 3 dimensions are required")
    if features.ndim > 3:
        features = features.reshape(features.shape[0], features.shape[1], -1)
    if features.shape[1] < 2:
        raise ValueError("`features` needs at least 2 views")
    if features.shape[1] > 2:
        # Reference only uses views 0 and 1; drop extras (rare path, one copy).
        features = features[:, :2, :]

    bsz, _, d = features.shape
    itemsize = jnp.dtype(features.dtype).itemsize
    sub = 16 if itemsize == 2 else 8

    # Dense lane layout: both views of a row are adjacent lane groups of one
    # contiguous block.  The reshape is contiguous -> free.
    feat2d = features.reshape(bsz, 2 * d)

    if tile_b is None:
        tile_b = _pick_tile_b(bsz, d, itemsize)
    tile_b = max(sub, _round_up(int(tile_b), sub))
    num_tiles = _cdiv(bsz, tile_b)

    # 2-way core split only where a second TensorCore exists (v4/v5p/v7x);
    # on single-TC v5e/v6e an extra grid axis is pure overhead.
    n_cores = 2 if (_multi_tensorcore() and num_tiles >= 2) else 1
    if n_cores == 2 and num_tiles % 2:
        # Rebalance so both cores get the same number of real tiles (avoids a
        # redundant clamped-overhang tile DMA/compute on one core).
        cand = max(sub, _round_up(_cdiv(bsz, num_tiles + 1), sub))
        if _cdiv(bsz, cand) % 2 == 0:
            tile_b = cand
            num_tiles = _cdiv(bsz, tile_b)
    inner = _cdiv(num_tiles, n_cores)

    def feat_index(c, j):
        # Clamp any overhang tile of an uneven core split in-bounds; the
        # kernel skips its compute entirely (row0 >= bsz).
        return (jnp.minimum(c * inner + j, num_tiles - 1), 0)

    partials = pl.pallas_call(
        functools.partial(_domain_loss_kernel, bsz=bsz),
        out_shape=jax.ShapeDtypeStruct((n_cores, 8, d), jnp.float32),
        grid_spec=pltpu.PrefetchScalarGridSpec(
            num_scalar_prefetch=0,
            grid=(n_cores, inner),
            in_specs=[pl.BlockSpec((tile_b, 2 * d), feat_index)],
            out_specs=pl.BlockSpec((1, 8, d), lambda c, j: (c, 0, 0)),
        ),
        compiler_params=pltpu.CompilerParams(
            dimension_semantics=("parallel", "arbitrary"),
            vmem_limit_bytes=32 * 1024 * 1024,
        ),
    )(feat2d)

    # Tiny epilogue: cross-lane/sublane/core reduce, batchmean, reciprocal.
    # (For num_tiles == 1 this could be folded in-kernel into an SMEM scalar
    #  to save one dispatch; kept in XLA for simplicity/robustness.)
    kl = jnp.sum(partials) / bsz
    return 1.0 / kl


def _domain_loss_ref(features):
    # Pure-JAX reference mirroring the PyTorch module (sanity check only).
    if features.ndim > 3:
        features = features.reshape(features.shape[0], features.shape[1], -1)
    a = features[:, 0, :].astype(jnp.float32)
    t = features[:, 1, :].astype(jnp.float32)

    def norm(x):
        m = jnp.mean(x, axis=-1, keepdims=True)
        cen = x - m
        v = jnp.mean(cen * cen, axis=-1, keepdims=True)
        return cen * lax.rsqrt(v + _EPS)

    a_n, t_n = norm(a), norm(t)
    elem = jnp.where(t_n == 0.0, 0.0, t_n * jnp.log(t_n)) - t_n * a_n
    return 1.0 / (jnp.sum(elem) / features.shape[0])


if __name__ == "__main__":
    key = jax.random.PRNGKey(0)
    k1, k2 = jax.random.split(key)

    # projection_dim = 128, batch = 8, n_views = 2 -> features [8, 2, 128]
    feats_small = jax.random.normal(k1, (8, 2, 128), dtype=jnp.float32)
    res_small = domain_loss(feats_small)
    jax.block_until_ready(res_small)
    ref_small = _domain_loss_ref(feats_small)
    # Faithfulness check: for generic inputs both sides are NaN, exactly like
    # the PyTorch reference (instance-normalized target has negative entries).
    assert np.allclose(np.asarray(res_small), np.asarray(ref_small),
                       rtol=1e-4, atol=1e-6, equal_nan=True), (res_small, ref_small)

    # Larger case exercising multi-tile accumulation, the partial-tile mask
    # and (on multi-TensorCore parts) the 2-way core split.
    feats_big = jax.random.normal(k2, (300, 2, 128), dtype=jnp.float32)
    res_big = domain_loss(feats_big, tile_b=64)
    jax.block_until_ready(res_big)
    ref_big = _domain_loss_ref(feats_big)
    assert np.allclose(np.asarray(res_big), np.asarray(ref_big),
                       rtol=1e-4, atol=1e-6, equal_nan=True), (res_big, ref_big)

    print("KERNEL_OK")
</pallas_src>

<mosaic_0001>
module attributes {stable_mosaic.version = 11 : i64} {
  func.func @_domain_loss_kernel(%arg0: i32, %arg1: i32, %arg2: memref<8x256xf32, #tpu.memory_space<vmem>>, %arg3: memref<1x8x128xf32, #tpu.memory_space<vmem>>) attributes {dimension_semantics = [#tpu.dimension_semantics<parallel>, #tpu.dimension_semantics<arbitrary>], iteration_bounds = array<i64: 1, 1>, scalar_prefetch = 0 : i64, scratch_operands = 0 : i64, tpu.core_type = #tpu.core_type<tc>, window_params = [{transform_indices = @transform_0, window_bounds = array<i64: 8, 256>}, {transform_indices = @transform_1, window_bounds = array<i64: 1, 8, 128>}]} {
    %c1_i32 = arith.constant 1 : i32
    %0 = arith.muli %arg0, %c1_i32 : i32
    %1 = arith.addi %0, %arg1 : i32
    %c8_i32 = arith.constant 8 : i32
    %2 = arith.muli %1, %c8_i32 : i32
    %c0_i32 = arith.constant 0 : i32
    %3 = arith.cmpi eq, %arg1, %c0_i32 : i32
    %4 = arith.extui %3 : i1 to i32
    %c0_i32_0 = arith.constant 0 : i32
    %5 = arith.cmpi ne, %4, %c0_i32_0 : i32
    scf.if %5 {
      %cst_10 = arith.constant 0.000000e+00 : f32
      %17 = vector.broadcast %cst_10 : f32 to vector<1x8x128xf32>
      %c0 = arith.constant 0 : index
      %c0_11 = arith.constant 0 : index
      %c0_12 = arith.constant 0 : index
      %18 = vector.load %arg3[%c0, %c0_11, %c0_12] : memref<1x8x128xf32, #tpu.memory_space<vmem>>, vector<1x8x128xf32>
      tpu.vector_store %arg3[%c0, %c0_11, %c0_12], %17 {strides = array<i32>} : memref<1x8x128xf32, #tpu.memory_space<vmem>>, vector<1x8x128xf32>,
    } else {
    }
    %cst = arith.constant 1.000000e+00 : f32
    %6 = vector.broadcast %cst : f32 to vector<128x1xf32>
    %c8_i32_1 = arith.constant 8 : i32
    %7 = arith.addi %2, %c8_i32_1 : i32
    %c8_i32_2 = arith.constant 8 : i32
    %8 = arith.cmpi sle, %7, %c8_i32_2 : i32
    %9 = arith.extui %8 : i1 to i32
    %cst_3 = arith.constant 7.812500e-03 : f32
    %c0_i32_4 = arith.constant 0 : i32
    %10 = arith.cmpi ne, %9, %c0_i32_4 : i32
    scf.if %10 {
      %c0 = arith.constant 0 : index
      %c0_10 = arith.constant 0 : index
      %17 = vector.load %arg2[%c0, %c0_10] : memref<8x256xf32, #tpu.memory_space<vmem>>, vector<8x128xf32>
      %c0_11 = arith.constant 0 : index
      %c128 = arith.constant 128 : index
      %18 = vector.load %arg2[%c0_11, %c128] : memref<8x256xf32, #tpu.memory_space<vmem>>, vector<8x128xf32>
      %cst_12 = arith.constant dense<0.000000e+00> : vector<8x1xf32>
      %19 = tpu.matmul %17, %6, %cst_12 {dimension_numbers = #tpu.dot_dimension_numbers<[1], [0], [0], [1], [0, 0, 1, 1], [], []>} : vector<8x128xf32>, vector<128x1xf32>, vector<8x1xf32> -> vector<8x1xf32>
      %20 = vector.broadcast %cst_3 : f32 to vector<8x1xf32>
      %21 = arith.mulf %19, %20 : vector<8x1xf32>
      %22 = vector.broadcast %21 : vector<8x1xf32> to vector<8x128xf32>
      %23 = arith.subf %17, %22 : vector<8x128xf32>
      %24 = arith.mulf %23, %23 : vector<8x128xf32>
      %cst_13 = arith.constant dense<0.000000e+00> : vector<8x1xf32>
      %25 = tpu.matmul %24, %6, %cst_13 {dimension_numbers = #tpu.dot_dimension_numbers<[1], [0], [0], [1], [0, 0, 1, 1], [], []>} : vector<8x128xf32>, vector<128x1xf32>, vector<8x1xf32> -> vector<8x1xf32>
      %26 = vector.broadcast %cst_3 : f32 to vector<8x1xf32>
      %27 = arith.mulf %25, %26 : vector<8x1xf32>
      %cst_14 = arith.constant 9.99999974E-6 : f32
      %28 = vector.broadcast %cst_14 : f32 to vector<8x1xf32>
      %29 = arith.addf %27, %28 : vector<8x1xf32>
      %30 = math.rsqrt %29 : vector<8x1xf32>
      %31 = vector.broadcast %30 : vector<8x1xf32> to vector<8x128xf32>
      %32 = arith.mulf %23, %31 : vector<8x128xf32>
      %cst_15 = arith.constant dense<0.000000e+00> : vector<8x1xf32>
      %33 = tpu.matmul %18, %6, %cst_15 {dimension_numbers = #tpu.dot_dimension_numbers<[1], [0], [0], [1], [0, 0, 1, 1], [], []>} : vector<8x128xf32>, vector<128x1xf32>, vector<8x1xf32> -> vector<8x1xf32>
      %34 = vector.broadcast %cst_3 : f32 to vector<8x1xf32>
      %35 = arith.mulf %33, %34 : vector<8x1xf32>
      %36 = vector.broadcast %35 : vector<8x1xf32> to vector<8x128xf32>
      %37 = arith.subf %18, %36 : vector<8x128xf32>
      %38 = arith.mulf %37, %37 : vector<8x128xf32>
      %cst_16 = arith.constant dense<0.000000e+00> : vector<8x1xf32>
      %39 = tpu.matmul %38, %6, %cst_16 {dimension_numbers = #tpu.dot_dimension_numbers<[1], [0], [0], [1], [0, 0, 1, 1], [], []>} : vector<8x128xf32>, vector<128x1xf32>, vector<8x1xf32> -> vector<8x1xf32>
      %40 = vector.broadcast %cst_3 : f32 to vector<8x1xf32>
      %41 = arith.mulf %39, %40 : vector<8x1xf32>
      %cst_17 = arith.constant 9.99999974E-6 : f32
      %42 = vector.broadcast %cst_17 : f32 to vector<8x1xf32>
      %43 = arith.addf %41, %42 : vector<8x1xf32>
      %44 = math.rsqrt %43 : vector<8x1xf32>
      %45 = vector.broadcast %44 : vector<8x1xf32> to vector<8x128xf32>
      %46 = arith.mulf %37, %45 : vector<8x128xf32>
      %cst_18 = arith.constant 0.000000e+00 : f32
      %47 = vector.broadcast %cst_18 : f32 to vector<8x128xf32>
      %48 = arith.cmpf oeq, %46, %47 : vector<8x128xf32>
      %49 = math.log %46 : vector<8x128xf32>
      %50 = arith.mulf %46, %49 : vector<8x128xf32>
      %cst_19 = arith.constant 0.000000e+00 : f32
      %51 = vector.broadcast %cst_19 : f32 to vector<8x128xf32>
      %52 = arith.select %48, %51, %50 : vector<8x128xi1>, vector<8x128xf32>
      %53 = arith.mulf %46, %32 : vector<8x128xf32>
      %54 = arith.subf %52, %53 : vector<8x128xf32>
      %55 = vector.shape_cast %54 : vector<8x128xf32> to vector<1x8x128xf32>
      %cst_20 = arith.constant dense<0.000000e+00> : vector<8x128xf32>
      %56 = vector.multi_reduction <add>, %55, %cst_20 [0] : vector<1x8x128xf32> to vector<8x128xf32>
      %c0_21 = arith.constant 0 : index
      %c0_22 = arith.constant 0 : index
      %c0_23 = arith.constant 0 : index
      %57 = vector.load %arg3[%c0_21, %c0_22, %c0_23] : memref<1x8x128xf32, #tpu.memory_space<vmem>>, vector<1x8x128xf32>
      %58 = vector.shape_cast %56 : vector<8x128xf32> to vector<1x8x128xf32>
      %59 = arith.addf %57, %58 : vector<1x8x128xf32>
      %c0_24 = arith.constant 0 : index
      %c0_25 = arith.constant 0 : index
      %c0_26 = arith.constant 0 : index
      %60 = vector.load %arg3[%c0_24, %c0_25, %c0_26] : memref<1x8x128xf32, #tpu.memory_space<vmem>>, vector<1x8x128xf32>
      tpu.vector_store %arg3[%c0_24, %c0_25, %c0_26], %59 {strides = array<i32>} : memref<1x8x128xf32, #tpu.memory_space<vmem>>, vector<1x8x128xf32>,
    } else {
    }
    %c8_i32_5 = arith.constant 8 : i32
    %11 = arith.cmpi slt, %2, %c8_i32_5 : i32
    %c8_i32_6 = arith.constant 8 : i32
    %12 = arith.addi %2, %c8_i32_6 : i32
    %c8_i32_7 = arith.constant 8 : i32
    %13 = arith.cmpi sgt, %12, %c8_i32_7 : i32
    %14 = arith.andi %11, %13 : i1
    %15 = arith.extui %14 : i1 to i32
    %cst_8 = arith.constant 7.812500e-03 : f32
    %c0_i32_9 = arith.constant 0 : i32
    %16 = arith.cmpi ne, %15, %c0_i32_9 : i32
    scf.if %16 {
      %17 = tpu.iota {dimensions = array<i32: 0>} : vector<8x1xi32>
      %18 = vector.broadcast %2 : i32 to vector<8x1xi32>
      %19 = arith.addi %18, %17 : vector<8x1xi32>
      %c8_i32_10 = arith.constant 8 : i32
      %20 = vector.broadcast %c8_i32_10 : i32 to vector<8x1xi32>
      %21 = arith.cmpi slt, %19, %20 : vector<8x1xi32>
      %c0 = arith.constant 0 : index
      %c0_11 = arith.constant 0 : index
      %22 = vector.load %arg2[%c0, %c0_11] : memref<8x256xf32, #tpu.memory_space<vmem>>, vector<8x128xf32>
      %c0_12 = arith.constant 0 : index
      %c128 = arith.constant 128 : index
      %23 = vector.load %arg2[%c0_12, %c128] : memref<8x256xf32, #tpu.memory_space<vmem>>, vector<8x128xf32>
      %cst_13 = arith.constant dense<0.000000e+00> : vector<8x1xf32>
      %24 = tpu.matmul %22, %6, %cst_13 {dimension_numbers = #tpu.dot_dimension_numbers<[1], [0], [0], [1], [0, 0, 1, 1], [], []>} : vector<8x128xf32>, vector<128x1xf32>, vector<8x1xf32> -> vector<8x1xf32>
      %25 = vector.broadcast %cst_8 : f32 to vector<8x1xf32>
      %26 = arith.mulf %24, %25 : vector<8x1xf32>
      %27 = vector.broadcast %26 : vector<8x1xf32> to vector<8x128xf32>
      %28 = arith.subf %22, %27 : vector<8x128xf32>
      %29 = arith.mulf %28, %28 : vector<8x128xf32>
      %cst_14 = arith.constant dense<0.000000e+00> : vector<8x1xf32>
      %30 = tpu.matmul %29, %6, %cst_14 {dimension_numbers = #tpu.dot_dimension_numbers<[1], [0], [0], [1], [0, 0, 1, 1], [], []>} : vector<8x128xf32>, vector<128x1xf32>, vector<8x1xf32> -> vector<8x1xf32>
      %31 = vector.broadcast %cst_8 : f32 to vector<8x1xf32>
      %32 = arith.mulf %30, %31 : vector<8x1xf32>
      %cst_15 = arith.constant 9.99999974E-6 : f32
      %33 = vector.broadcast %cst_15 : f32 to vector<8x1xf32>
      %34 = arith.addf %32, %33 : vector<8x1xf32>
      %35 = math.rsqrt %34 : vector<8x1xf32>
      %36 = vector.broadcast %35 : vector<8x1xf32> to vector<8x128xf32>
      %37 = arith.mulf %28, %36 : vector<8x128xf32>
      %cst_16 = arith.constant dense<0.000000e+00> : vector<8x1xf32>
      %38 = tpu.matmul %23, %6, %cst_16 {dimension_numbers = #tpu.dot_dimension_numbers<[1], [0], [0], [1], [0, 0, 1, 1], [], []>} : vector<8x128xf32>, vector<128x1xf32>, vector<8x1xf32> -> vector<8x1xf32>
      %39 = vector.broadcast %cst_8 : f32 to vector<8x1xf32>
      %40 = arith.mulf %38, %39 : vector<8x1xf32>
      %41 = vector.broadcast %40 : vector<8x1xf32> to vector<8x128xf32>
      %42 = arith.subf %23, %41 : vector<8x128xf32>
      %43 = arith.mulf %42, %42 : vector<8x128xf32>
      %cst_17 = arith.constant dense<0.000000e+00> : vector<8x1xf32>
      %44 = tpu.matmul %43, %6, %cst_17 {dimension_numbers = #tpu.dot_dimension_numbers<[1], [0], [0], [1], [0, 0, 1, 1], [], []>} : vector<8x128xf32>, vector<128x1xf32>, vector<8x1xf32> -> vector<8x1xf32>
      %45 = vector.broadcast %cst_8 : f32 to vector<8x1xf32>
      %46 = arith.mulf %44, %45 : vector<8x1xf32>
      %cst_18 = arith.constant 9.99999974E-6 : f32
      %47 = vector.broadcast %cst_18 : f32 to vector<8x1xf32>
      %48 = arith.addf %46, %47 : vector<8x1xf32>
      %49 = math.rsqrt %48 : vector<8x1xf32>
      %50 = vector.broadcast %49 : vector<8x1xf32> to vector<8x128xf32>
      %51 = arith.mulf %42, %50 : vector<8x128xf32>
      %cst_19 = arith.constant 0.000000e+00 : f32
      %52 = vector.broadcast %cst_19 : f32 to vector<8x128xf32>
      %53 = arith.cmpf oeq, %51, %52 : vector<8x128xf32>
      %54 = math.log %51 : vector<8x128xf32>
      %55 = arith.mulf %51, %54 : vector<8x128xf32>
      %cst_20 = arith.constant 0.000000e+00 : f32
      %56 = vector.broadcast %cst_20 : f32 to vector<8x128xf32>
      %57 = arith.select %53, %56, %55 : vector<8x128xi1>, vector<8x128xf32>
      %58 = arith.mulf %51, %37 : vector<8x128xf32>
      %59 = arith.subf %57, %58 : vector<8x128xf32>
      %cst_21 = arith.constant 0.000000e+00 : f32
      %60 = vector.shape_cast %21 : vector<8x1xi1> to vector<8x1xi1>
      %61 = vector.broadcast %60 : vector<8x1xi1> to vector<8x128xi1>
      %62 = vector.broadcast %cst_21 : f32 to vector<8x128xf32>
      %63 = arith.select %61, %59, %62 : vector<8x128xi1>, vector<8x128xf32>
      %64 = vector.shape_cast %63 : vector<8x128xf32> to vector<1x8x128xf32>
      %cst_22 = arith.constant dense<0.000000e+00> : vector<8x128xf32>
      %65 = vector.multi_reduction <add>, %64, %cst_22 [0] : vector<1x8x128xf32> to vector<8x128xf32>
      %c0_23 = arith.constant 0 : index
      %c0_24 = arith.constant 0 : index
      %c0_25 = arith.constant 0 : index
      %66 = vector.load %arg3[%c0_23, %c0_24, %c0_25] : memref<1x8x128xf32, #tpu.memory_space<vmem>>, vector<1x8x128xf32>
      %67 = vector.shape_cast %65 : vector<8x128xf32> to vector<1x8x128xf32>
      %68 = arith.addf %66, %67 : vector<1x8x128xf32>
      %c0_26 = arith.constant 0 : index
      %c0_27 = arith.constant 0 : index
      %c0_28 = arith.constant 0 : index
      %69 = vector.load %arg3[%c0_26, %c0_27, %c0_28] : memref<1x8x128xf32, #tpu.memory_space<vmem>>, vector<1x8x128xf32>
      tpu.vector_store %arg3[%c0_26, %c0_27, %c0_28], %68 {strides = array<i32>} : memref<1x8x128xf32, #tpu.memory_space<vmem>>, vector<1x8x128xf32>,
    } else {
    }
    return
  }
  func.func @transform_0(%arg0: i32, %arg1: i32) -> (i32, i32) {
    %c1_i32 = arith.constant 1 : i32
    %0 = arith.muli %arg0, %c1_i32 : i32
    %1 = arith.addi %0, %arg1 : i32
    %c0_i32 = arith.constant 0 : i32
    %2 = arith.minsi %1, %c0_i32 : i32
    %c0_i32_0 = arith.constant 0 : i32
    %c0_i32_1 = arith.constant 0 : i32
    return %2, %c0_i32_0 : i32, i32
  }
  func.func @transform_1(%arg0: i32, %arg1: i32) -> (i32, i32, i32) {
    %c0_i32 = arith.constant 0 : i32
    %c0_i32_0 = arith.constant 0 : i32
    %c0_i32_1 = arith.constant 0 : i32
    return %arg0, %c0_i32, %c0_i32_0 : i32, i32, i32
  }
}

</mosaic_0001>

<llo_original>
// kernel: tpu_custom_call.1
$region0: #{tpu_custom_call.1}
  #allocation0 [shape = 'u32[]', space=smem, size = 0x4, offset = 0x4, fixed_abs, tag = 'smem constant byte address 0x4 - core index']
  #allocation1 [shape = 'u32[72,128]{1,0:T(1,128)}', space=vmem, size = 0x9000, scoped, tag = 'internal scratch']
  %s0 = inlined_call_operand.hbm [shape: f32[8,256], index: 0, kind: input, shape index: {}]
  %s1 = inlined_call_operand.hbm [shape: f32[1,8,128], index: 1, kind: output, shape index: {}]
  %s2 = sld [smem:[#allocation0]]
  $region30: #{tpu_custom_call.1} parent=0
    _
  %s4 = ssub.s32 1, %s2
  %s5 = scalar_select 0, %s4, %s2
  $region1: #{tpu_custom_call.1} parent=0
    #allocation2 [shape = 'u8[8192]{0}', space=vmem, size = 0x2000, scoped, tag = 'input window, operand 0, single buffered']
    #allocation3 [shape = 's32[1]{0}', space=sflag, size = 0x4, scoped, tag = 'scoped memory for tpu_custom_call.1']
    #allocation4 [shape = 's32[1]{0}', space=sflag, size = 0x4, scoped, tag = 'scoped memory for tpu_custom_call.1']
    #allocation5 [shape = 'u8[4096]{0}', space=vmem, size = 0x1000, scoped, tag = 'output window, operand 0, single buffered']
    %6 = vsyncpa [#allocation3], 0
    %7 = vsyncpa [#allocation4], 0
    // Predicated region
    $region2: #{tpu_custom_call.1} parent=1 // pred_check
      _
    $region3: #{tpu_custom_call.1} parent=1 // pred_check_branch
      %9 = sbr.rel (0) target = $region5
    $region4: #{tpu_custom_call.1} parent=1 // pred_region
      %s10 = sadd.s32 0, 0
      %p11 = scmp.lt.s32.totalorder %s10, 0
      %s12 = scalar_select %p11, %s10, 0
      %14 = vsyncadd [#allocation3], 0
      %s15 = smul.addr %s12, 2
      %s16 = smul.addr %s15, 8
      %s17 = scalar_lea.hbm %s0, %s16
      %s19 = sshll.u32 %s17, 4
      %s20 = int_to_ptr.hbm [resolvable:$true] %s19
      %s21 = sshll.u32 [#allocation2], 4
      %s22 = int_to_ptr.vmem [resolvable:$true] %s21
      %24 = dma.hbm_to_vmem [thread:$0]  %s20, 256, %s22, [#allocation3]
    $region5: #{tpu_custom_call.1} parent=1 // pred_fallthru
      _
    // Predicated region
    $region6: #{tpu_custom_call.1} parent=1 // pred_check
      _
    $region7: #{tpu_custom_call.1} parent=1 // pred_check_branch
      %26 = sbr.rel (0) target = $region9
    $region8: #{tpu_custom_call.1} parent=1 // pred_region
      %28 = dma.done [#allocation3], 256
    $region9: #{tpu_custom_call.1} parent=1 // pred_fallthru
      _
    %s29 = sadd.s32 0, 0
    %p30 = scmp.lt.s32.totalorder %s29, 0
    %s31 = scalar_select %p30, %s29, 0
    %s32 = sadd.s32 0, 0
    %s33 = smul.u32 %s32, 8
    %p34 = scmp.eq.s32.totalorder 0, 0
    // Predicated region
    $region10: #{tpu_custom_call.1} parent=1 // pred_check
      %p35 = pneg %p34
    $region11: #{tpu_custom_call.1} parent=1 // pred_check_branch
      %37 = sbr.rel (%p35) target = $region13
    $region12: #{tpu_custom_call.1} parent=1 // pred_region
      %38 = vst [vmem:[#allocation5] sm:$0xff] 0.0
    $region13: #{tpu_custom_call.1} parent=1 // pred_fallthru
      _
    %s39 = sadd.s32 %s33, 8
    %p40 = scmp.le.s32.totalorder %s39, 8
    // Predicated region
    $region14: #{tpu_custom_call.1} parent=1 // pred_check
      %p41 = pneg %p40
    $region15: #{tpu_custom_call.1} parent=1 // pred_check_branch
      %43 = sbr.rel (%p41) target = $region17
    $region16: #{tpu_custom_call.1} parent=1 // pred_region
      %v44 = vld [vmem:[#allocation2] sm:$0xff]
      %v45 = vld [vmem:[#allocation2 + $0x8] sm:$0xff]
      %46 = vmatpush.msra.mxu0 1.0
      %47 = vmatpush.msra.mxu0 1.0
      %48 = vmatpush.msra.mxu0 1.0
      %49 = vmatpush.msra.mxu0 1.0
      %50 = vmatpush.msra.mxu0 1.0
      %51 = vmatpush.msra.mxu0 1.0
      %52 = vmatpush.msra.mxu0 1.0
      %53 = vmatpush.msra.mxu0 1.0
      %54 = vmatpush.msra.mxu0 1.0
      %55 = vmatpush.msra.mxu0 1.0
      %56 = vmatpush.msra.mxu0 1.0
      %57 = vmatpush.msra.mxu0 1.0
      %58 = vmatpush.msra.mxu0 1.0
      %59 = vmatpush.msra.mxu0 1.0
      %60 = vmatpush.msra.mxu0 1.0
      %61 = vmatpush.msra.mxu0 1.0
      %62 = vmatmul.f32.gmra.mxu0 %v44
      %v63 = vpop.f32.mrf.mxu0
      %v64 = vadd.f32 0.0, %v63
      %65 = vdwg.mxu0
      %v66 = vmul.f32 %v64, 0.0078125
      %68 = vset.pattern.permute.xlu0 0
      %69 = vperm.xlu0 %68, %v66
      %v70 = vpop.permute.xlu0 %69
      %v72 = vsub.f32 %v44, %v70
      %v73 = vmul.f32 %v72, %v72
      %74 = vmatpush.msra.mxu0 1.0
      %75 = vmatpush.msra.mxu0 1.0
      %76 = vmatpush.msra.mxu0 1.0
      %77 = vmatpush.msra.mxu0 1.0
      %78 = vmatpush.msra.mxu0 1.0
      %79 = vmatpush.msra.mxu0 1.0
      %80 = vmatpush.msra.mxu0 1.0
      %81 = vmatpush.msra.mxu0 1.0
      %82 = vmatpush.msra.mxu0 1.0
      %83 = vmatpush.msra.mxu0 1.0
      %84 = vmatpush.msra.mxu0 1.0
      %85 = vmatpush.msra.mxu0 1.0
      %86 = vmatpush.msra.mxu0 1.0
      %87 = vmatpush.msra.mxu0 1.0
      %88 = vmatpush.msra.mxu0 1.0
      %89 = vmatpush.msra.mxu0 1.0
      %90 = vmatmul.f32.gmra.mxu0 %v73
      %v91 = vpop.f32.mrf.mxu0
      %v92 = vadd.f32 0.0, %v91
      %93 = vdwg.mxu0
      %v94 = vmul.f32 %v92, 0.0078125
      %v95 = vadd.f32 %v94, 1e-05
      %v96 = vrsqrt.pop %v95
      %v97 = vmul.f32 %v96, %v95
      %v98 = vmul.f32 %v97, %v96
      %v99 = vmul.f32 0.5, %v98
      %v100 = vsub.f32 1.5, %v99
      %v101 = vmul.f32 %v96, %v100
      %vm102 = vweird.f32 %v95
      %vm103 = vweird.f32 %v96
      %vm104 = vmor %vm102, %vm103
      %v105 = vsel %vm104, %v96, %v101
      %107 = vset.pattern.permute.xlu0 0
      %108 = vperm.xlu0 %107, %v105
      %v109 = vpop.permute.xlu0 %108
      %v111 = vmul.f32 %v72, %v109
      %112 = vmatpush.msra.mxu0 1.0
      %113 = vmatpush.msra.mxu0 1.0
      %114 = vmatpush.msra.mxu0 1.0
      %115 = vmatpush.msra.mxu0 1.0
      %116 = vmatpush.msra.mxu0 1.0
      %117 = vmatpush.msra.mxu0 1.0
      %118 = vmatpush.msra.mxu0 1.0
      %119 = vmatpush.msra.mxu0 1.0
      %120 = vmatpush.msra.mxu0 1.0
      %121 = vmatpush.msra.mxu0 1.0
      %122 = vmatpush.msra.mxu0 1.0
      %123 = vmatpush.msra.mxu0 1.0
      %124 = vmatpush.msra.mxu0 1.0
      %125 = vmatpush.msra.mxu0 1.0
      %126 = vmatpush.msra.mxu0 1.0
      %127 = vmatpush.msra.mxu0 1.0
      %128 = vmatmul.f32.gmra.mxu0 %v45
      %v129 = vpop.f32.mrf.mxu0
      %v130 = vadd.f32 0.0, %v129
      %131 = vdwg.mxu0
      %v132 = vmul.f32 %v130, 0.0078125
      %134 = vset.pattern.permute.xlu0 0
      %135 = vperm.xlu0 %134, %v132
      %v136 = vpop.permute.xlu0 %135
      %v138 = vsub.f32 %v45, %v136
      %v139 = vmul.f32 %v138, %v138
      %140 = vmatpush.msra.mxu0 1.0
      %141 = vmatpush.msra.mxu0 1.0
      %142 = vmatpush.msra.mxu0 1.0
      %143 = vmatpush.msra.mxu0 1.0
      %144 = vmatpush.msra.mxu0 1.0
      %145 = vmatpush.msra.mxu0 1.0
      %146 = vmatpush.msra.mxu0 1.0
      %147 = vmatpush.msra.mxu0 1.0
      %148 = vmatpush.msra.mxu0 1.0
      %149 = vmatpush.msra.mxu0 1.0
      %150 = vmatpush.msra.mxu0 1.0
      %151 = vmatpush.msra.mxu0 1.0
      %152 = vmatpush.msra.mxu0 1.0
      %153 = vmatpush.msra.mxu0 1.0
      %154 = vmatpush.msra.mxu0 1.0
      %155 = vmatpush.msra.mxu0 1.0
      %156 = vmatmul.f32.gmra.mxu0 %v139
      %v157 = vpop.f32.mrf.mxu0
      %v158 = vadd.f32 0.0, %v157
      %159 = vdwg.mxu0
      %v160 = vmul.f32 %v158, 0.0078125
      %v161 = vadd.f32 %v160, 1e-05
      %v162 = vrsqrt.pop %v161
      %v163 = vmul.f32 %v162, %v161
      %v164 = vmul.f32 %v163, %v162
      %v165 = vmul.f32 0.5, %v164
      %v166 = vsub.f32 1.5, %v165
      %v167 = vmul.f32 %v162, %v166
      %vm168 = vweird.f32 %v161
      %vm169 = vweird.f32 %v162
      %vm170 = vmor %vm168, %vm169
      %v171 = vsel %vm170, %v162, %v167
      %173 = vset.pattern.permute.xlu0 0
      %174 = vperm.xlu0 %173, %v171
      %v175 = vpop.permute.xlu0 %174
      %v177 = vmul.f32 %v138, %v175
      %vm178 = vcmp.eq.f32.partialorder %v177, 0.0
      %v179 = vlog2.pop %v177
      %v180 = vmul.f32 %v179, 0.6931472
      %v181 = vmul.f32 %v177, %v180
      %v182 = vsel %vm178, 0.0, %v181
      %v183 = vmul.f32 %v177, %v111
      %v184 = vsub.f32 %v182, %v183
      %v185 = vadd.f32 %v184, 0.0
      %v186 = vld [vmem:[#allocation5] sm:$0xff]
      %v187 = vadd.f32 %v186, %v185
      %188 = vst [vmem:[#allocation5] sm:$0xff] %v187
    $region17: #{tpu_custom_call.1} parent=1 // pred_fallthru
      _
    %p189 = scmp.lt.s32.totalorder %s33, 8
    %p190 = scmp.gt.s32.totalorder %s39, 8
    %p191 = pnand %p189, %p190
    %p192 = pneg %p191
    // Predicated region
    $region18: #{tpu_custom_call.1} parent=1 // pred_check
      _
    $region19: #{tpu_custom_call.1} parent=1 // pred_check_branch
      %194 = sbr.rel (%p191) target = $region21
    $region20: #{tpu_custom_call.1} parent=1 // pred_region
      %v195 = vlaneseq
      %v196 = vshrl.u32 %v195, 7
      %v197 = vstv %s33
      %v198 = vadd.s32 %v197, %v196
      %vm199 = vcmp.lt.s32.totalorder %v198, 8
      %v200 = vld [vmem:[#allocation2] sm:$0xff]
      %v201 = vld [vmem:[#allocation2 + $0x8] sm:$0xff]
      %202 = vmatpush.msra.mxu0 1.0
      %203 = vmatpush.msra.mxu0 1.0
      %204 = vmatpush.msra.mxu0 1.0
      %205 = vmatpush.msra.mxu0 1.0
      %206 = vmatpush.msra.mxu0 1.0
      %207 = vmatpush.msra.mxu0 1.0
      %208 = vmatpush.msra.mxu0 1.0
      %209 = vmatpush.msra.mxu0 1.0
      %210 = vmatpush.msra.mxu0 1.0
      %211 = vmatpush.msra.mxu0 1.0
      %212 = vmatpush.msra.mxu0 1.0
      %213 = vmatpush.msra.mxu0 1.0
      %214 = vmatpush.msra.mxu0 1.0
      %215 = vmatpush.msra.mxu0 1.0
      %216 = vmatpush.msra.mxu0 1.0
      %217 = vmatpush.msra.mxu0 1.0
      %218 = vmatmul.f32.gmra.mxu0 %v200
      %v219 = vpop.f32.mrf.mxu0
      %v220 = vadd.f32 0.0, %v219
      %221 = vdwg.mxu0
      %v222 = vmul.f32 %v220, 0.0078125
      %224 = vset.pattern.permute.xlu0 0
      %225 = vperm.xlu0 %224, %v222
      %v226 = vpop.permute.xlu0 %225
      %v228 = vsub.f32 %v200, %v226
      %v229 = vmul.f32 %v228, %v228
      %230 = vmatpush.msra.mxu0 1.0
      %231 = vmatpush.msra.mxu0 1.0
      %232 = vmatpush.msra.mxu0 1.0
      %233 = vmatpush.msra.mxu0 1.0
      %234 = vmatpush.msra.mxu0 1.0
      %235 = vmatpush.msra.mxu0 1.0
      %236 = vmatpush.msra.mxu0 1.0
      %237 = vmatpush.msra.mxu0 1.0
      %238 = vmatpush.msra.mxu0 1.0
      %239 = vmatpush.msra.mxu0 1.0
      %240 = vmatpush.msra.mxu0 1.0
      %241 = vmatpush.msra.mxu0 1.0
      %242 = vmatpush.msra.mxu0 1.0
      %243 = vmatpush.msra.mxu0 1.0
      %244 = vmatpush.msra.mxu0 1.0
      %245 = vmatpush.msra.mxu0 1.0
      %246 = vmatmul.f32.gmra.mxu0 %v229
      %v247 = vpop.f32.mrf.mxu0
      %v248 = vadd.f32 0.0, %v247
      %249 = vdwg.mxu0
      %v250 = vmul.f32 %v248, 0.0078125
      %v251 = vadd.f32 %v250, 1e-05
      %v252 = vrsqrt.pop %v251
      %v253 = vmul.f32 %v252, %v251
      %v254 = vmul.f32 %v253, %v252
      %v255 = vmul.f32 0.5, %v254
      %v256 = vsub.f32 1.5, %v255
      %v257 = vmul.f32 %v252, %v256
      %vm258 = vweird.f32 %v251
      %vm259 = vweird.f32 %v252
      %vm260 = vmor %vm258, %vm259
      %v261 = vsel %vm260, %v252, %v257
      %263 = vset.pattern.permute.xlu0 0
      %264 = vperm.xlu0 %263, %v261
      %v265 = vpop.permute.xlu0 %264
      %v267 = vmul.f32 %v228, %v265
      %268 = vmatpush.msra.mxu0 1.0
      %269 = vmatpush.msra.mxu0 1.0
      %270 = vmatpush.msra.mxu0 1.0
      %271 = vmatpush.msra.mxu0 1.0
      %272 = vmatpush.msra.mxu0 1.0
      %273 = vmatpush.msra.mxu0 1.0
      %274 = vmatpush.msra.mxu0 1.0
      %275 = vmatpush.msra.mxu0 1.0
      %276 = vmatpush.msra.mxu0 1.0
      %277 = vmatpush.msra.mxu0 1.0
      %278 = vmatpush.msra.mxu0 1.0
      %279 = vmatpush.msra.mxu0 1.0
      %280 = vmatpush.msra.mxu0 1.0
      %281 = vmatpush.msra.mxu0 1.0
      %282 = vmatpush.msra.mxu0 1.0
      %283 = vmatpush.msra.mxu0 1.0
      %284 = vmatmul.f32.gmra.mxu0 %v201
      %v285 = vpop.f32.mrf.mxu0
      %v286 = vadd.f32 0.0, %v285
      %287 = vdwg.mxu0
      %v288 = vmul.f32 %v286, 0.0078125
      %290 = vset.pattern.permute.xlu0 0
      %291 = vperm.xlu0 %290, %v288
      %v292 = vpop.permute.xlu0 %291
      %v294 = vsub.f32 %v201, %v292
      %v295 = vmul.f32 %v294, %v294
      %296 = vmatpush.msra.mxu0 1.0
      %297 = vmatpush.msra.mxu0 1.0
      %298 = vmatpush.msra.mxu0 1.0
      %299 = vmatpush.msra.mxu0 1.0
      %300 = vmatpush.msra.mxu0 1.0
      %301 = vmatpush.msra.mxu0 1.0
      %302 = vmatpush.msra.mxu0 1.0
      %303 = vmatpush.msra.mxu0 1.0
      %304 = vmatpush.msra.mxu0 1.0
      %305 = vmatpush.msra.mxu0 1.0
      %306 = vmatpush.msra.mxu0 1.0
      %307 = vmatpush.msra.mxu0 1.0
      %308 = vmatpush.msra.mxu0 1.0
      %309 = vmatpush.msra.mxu0 1.0
      %310 = vmatpush.msra.mxu0 1.0
      %311 = vmatpush.msra.mxu0 1.0
      %312 = vmatmul.f32.gmra.mxu0 %v295
      %v313 = vpop.f32.mrf.mxu0
      %v314 = vadd.f32 0.0, %v313
      %315 = vdwg.mxu0
      %v316 = vmul.f32 %v314, 0.0078125
      %v317 = vadd.f32 %v316, 1e-05
      %v318 = vrsqrt.pop %v317
      %v319 = vmul.f32 %v318, %v317
      %v320 = vmul.f32 %v319, %v318
      %v321 = vmul.f32 0.5, %v320
      %v322 = vsub.f32 1.5, %v321
      %v323 = vmul.f32 %v318, %v322
      %vm324 = vweird.f32 %v317
      %vm325 = vweird.f32 %v318
      %vm326 = vmor %vm324, %vm325
      %v327 = vsel %vm326, %v318, %v323
      %329 = vset.pattern.permute.xlu0 0
      %330 = vperm.xlu0 %329, %v327
      %v331 = vpop.permute.xlu0 %330
      %v333 = vmul.f32 %v294, %v331
      %vm334 = vcmp.eq.f32.partialorder %v333, 0.0
      %v335 = vlog2.pop %v333
      %v336 = vmul.f32 %v335, 0.6931472
      %v337 = vmul.f32 %v333, %v336
      %v338 = vsel %vm334, 0.0, %v337
      %v339 = vmul.f32 %v333, %v267
      %v340 = vsub.f32 %v338, %v339
      %v341 = vsel %vm199, 1, 0
      %vm342 = vcmp.eq.s32.totalorder %v341, 1
      %v343 = vsel %vm342, %v340, 0.0
      %v344 = vadd.f32 %v343, 0.0
      %v345 = vld [vmem:[#allocation5] sm:$0xff]
      %v346 = vadd.f32 %v345, %v344
      %347 = vst [vmem:[#allocation5] sm:$0xff] %v346
    $region21: #{tpu_custom_call.1} parent=1 // pred_fallthru
      _
    // Predicated region
    $region22: #{tpu_custom_call.1} parent=1 // pred_check
      _
    $region23: #{tpu_custom_call.1} parent=1 // pred_check_branch
      %349 = sbr.rel (0) target = $region25
    $region24: #{tpu_custom_call.1} parent=1 // pred_region
      %351 = vsyncadd [#allocation4], 0
      %s353 = sshll.u32 [#allocation5], 4
      %s354 = int_to_ptr.vmem [resolvable:$true] %s353
      %s355 = sshll.u32 %s1, 4
      %s356 = int_to_ptr.hbm [resolvable:$true] %s355
      %358 = dma.vmem_to_hbm [thread:$0]  %s354, 128, %s356, [#allocation4]
    $region25: #{tpu_custom_call.1} parent=1 // pred_fallthru
      _
    // Predicated region
    $region26: #{tpu_custom_call.1} parent=1 // pred_check
      _
    $region27: #{tpu_custom_call.1} parent=1 // pred_check_branch
      %360 = sbr.rel (0) target = $region29
    $region28: #{tpu_custom_call.1} parent=1 // pred_region
      %362 = dma.done [#allocation4], 128
    $region29: #{tpu_custom_call.1} parent=1 // pred_fallthru
      _
    %363 = vsyncpa [#allocation3], 1
    %364 = vsyncpa [#allocation4], 1

</llo_original>
